<compile_context>
chip_gen: v7x
topology: tpu7x:2x2x1
jax: 0.10.0
libtpu: 0.0.40
codegen_flags: <defaults>
</compile_context>

<pallas_src>
import functools
import math

import jax
import jax.numpy as jnp
import numpy as np
from jax.experimental import pallas as pl
from jax.experimental.pallas import tpu as pltpu


def _arcface_kernel(labels_ref, emb_ref, w_ref, loss_ref,
                    e_sc, m_sc, s_sc, t_sc, *,
                    margin, scale, tile_c, num_class_tiles):
    j = pl.program_id(1)              # class-tile index (reduction axis, inner)

    @pl.when(j == 0)
    def _init():
        # Normalize the (tile_b, E) embeddings once per batch tile.
        e = emb_ref[...].astype(jnp.float32)
        e = e * jax.lax.rsqrt(jnp.sum(e * e, axis=-1, keepdims=True))
        e_sc[...] = e.astype(e_sc.dtype)          # stored in W's dtype for the MXU
        m_sc[...] = jnp.full_like(m_sc, -jnp.inf)
        s_sc[...] = jnp.zeros_like(s_sc)
        t_sc[...] = jnp.zeros_like(t_sc)

    w = w_ref[...]                                # (tile_c, E), native dtype (f32/bf16)

    # Per-class inverse L2 norms as a (1, tile_c) row (classes on lanes):
    # sum_e w^2 via a tiny ones x (w*w) MXU contraction -> no vector relayout.
    ones_row = jnp.ones((8, w.shape[-1]), dtype=w.dtype)
    sumsq = jax.lax.dot_general(
        ones_row, w * w,
        dimension_numbers=(((1,), (1,)), ((), ())),
        preferred_element_type=jnp.float32)[0:1, :]          # (1, tile_c)
    inv_wn = jax.lax.rsqrt(sumsq)                            # (1, tile_c)

    # Cosines for this tile: MXU consumes W (and e) in W's native dtype,
    # accumulates in f32; W-norms are folded into the output columns.
    cos = jax.lax.dot_general(
        e_sc[...], w,
        dimension_numbers=(((1,), (1,)), ((), ())),
        preferred_element_type=jnp.float32) * inv_wn          # (tile_b, tile_c)

    lab = labels_ref[...]                                     # (tile_b, 1) int32
    base = j * tile_c
    col = jax.lax.broadcasted_iota(jnp.int32, cos.shape, 1) + base
    mask = lab == col                                         # (tile_b, tile_c)

    # --- ArcFace margin, computed on the (tile_b, 1) target cosine only ---
    tgt = jnp.sum(jnp.where(mask, cos, 0.0), axis=-1, keepdims=True)  # (tile_b, 1)
    eps = 1e-6
    c = jnp.clip(tgt, -1.0 + eps, 1.0 - eps)
    # cos(acos(c) + m) = c*cos(m) - sqrt(1 - c^2)*sin(m)  (exact identity)
    mod = (c * np.float32(np.cos(margin))
           - jnp.sqrt(1.0 - c * c) * np.float32(np.sin(margin)))
    delta = (mod - tgt) * scale                               # (tile_b, 1)
    in_tile = (lab >= base) & (lab < base + tile_c)           # (tile_b, 1)

    logits = cos * scale + jnp.where(mask, delta, 0.0)        # (tile_b, tile_c)

    # --- online log-sum-exp + target-logit accumulation (cross entropy) ---
    m_new = jnp.maximum(m_sc[...], jnp.max(logits, axis=-1, keepdims=True))
    s_sc[...] = s_sc[...] * jnp.exp(m_sc[...] - m_new) + jnp.sum(
        jnp.exp(logits - m_new), axis=-1, keepdims=True)
    m_sc[...] = m_new
    t_sc[...] = t_sc[...] + jnp.where(in_tile, mod * scale, jnp.zeros_like(mod))

    @pl.when(j == num_class_tiles - 1)
    def _finalize():
        # Per-row loss; the (cheap) mean over B is done in the wrapper.
        loss_ref[...] = m_sc[...] + jnp.log(s_sc[...]) - t_sc[...]


# ----------------------------- wrapper helpers -------------------------------

_SUBLANE = {1: 32, 2: 16, 4: 8, 8: 8}      # second-minor tile per itemsize


def _round_up(x, m):
    return -(-x // m) * m


def _padded_bytes(rows, cols, dtype):
    it = jnp.dtype(dtype).itemsize
    return (_round_up(max(rows, 1), _SUBLANE.get(it, 8))
            * _round_up(max(cols, 1), 128) * it)


def _divisors(n):
    out = set()
    for d in range(1, int(math.isqrt(n)) + 1):
        if n % d == 0:
            out.add(d)
            out.add(n // d)
    return out


def _vmem_capacity_bytes():
    try:
        cap = int(getattr(pltpu.get_tpu_info(), "vmem_capacity_bytes", 0))
        if cap > 0:
            return cap
    except Exception:
        pass
    return 64 * 1024 * 1024      # v7x-sized fallback: safe on every generation


def arcface_loss(embeddings, labels, W, *, margin=0.9, scale=200.0,
                 tile_b=None, tile_c=None, w_buffers=2, vmem_fraction=0.70):
    """embeddings: (B, E), labels: (B,) int, W: (C, E) -> scalar f32 loss.

    W is streamed in its input dtype (pass bf16 W to halve HBM traffic); the
    MXU consumes that dtype natively and all accumulation is f32.
    """
    B, E = embeddings.shape
    C, E2 = W.shape
    assert E == E2 and labels.shape == (B,)
    w_dtype = jnp.dtype(W.dtype)
    emb_dtype = jnp.dtype(embeddings.dtype)
    w_sublane = _SUBLANE.get(w_dtype.itemsize, 8)

    # --- batch tile (parallel / megacore-friendly axis) ---
    if tile_b is None:
        if B <= 256:
            tile_b = B
        else:
            cands = [d for d in _divisors(B) if d <= 256 and d % 8 == 0]
            tile_b = max(cands) if cands else B
    assert B % tile_b == 0
    assert tile_b == B or tile_b % 8 == 0, "batch tile must be sublane-aligned"
    n_b = B // tile_b

    # --- VMEM model: includes compiler temporaries (per perf review) ---
    fixed = (2 * _padded_bytes(tile_b, E, emb_dtype)       # embeddings (dbl buf)
             + 2 * _padded_bytes(tile_b, 1, jnp.int32)     # labels (dbl buf)
             + _padded_bytes(tile_b, E, w_dtype)           # normalized-emb scratch
             + 3 * _padded_bytes(tile_b, 1, jnp.float32)   # m / s / t scratch
             + 2 * _padded_bytes(tile_b, 1, jnp.float32)   # per-row loss output
             + (1 << 20))                                  # slack

    def vmem_need(tc):
        return (fixed
                + w_buffers * _padded_bytes(tc, E, w_dtype)    # W pipeline buffers
                + _padded_bytes(tc, E, w_dtype)                # w*w temporary
                + 5 * _padded_bytes(tile_b, tc, jnp.float32)   # cos/logits/exp/mask/iota
                + _padded_bytes(8, tc, jnp.float32))           # per-class sumsq row

    cap = _vmem_capacity_bytes()
    budget = int(cap * vmem_fraction)

    if tile_c is None:
        if vmem_need(C) <= budget:
            tile_c = C                               # single class tile
        else:
            divs = _divisors(C)
            tile_c = None
            for align in (256, 128, w_sublane):      # lane-dense first
                cands = [d for d in divs if d % align == 0 and vmem_need(d) <= budget]
                if cands:
                    tile_c = max(cands)
                    break
            if tile_c is None:
                # Best effort: smallest sublane-aligned divisor (may exceed budget).
                cands = sorted(d for d in divs if d % w_sublane == 0)
                tile_c = cands[0] if cands else C
    assert C % tile_c == 0, "num_classes must be divisible by the class tile"
    assert tile_c == C or tile_c % w_sublane == 0, (
        "class tile must be aligned to the W dtype sublane tile")
    n_c = C // tile_c

    vmem_limit = int(min(cap * 0.98,
                         max(32 * 1024 * 1024, vmem_need(tile_c) * 1.25)))

    labels2d = labels.astype(jnp.int32).reshape(B, 1)

    kernel = functools.partial(
        _arcface_kernel, margin=float(margin), scale=float(scale),
        tile_c=tile_c, num_class_tiles=n_c)

    w_spec_kwargs = {}
    if w_buffers != 2:
        w_spec_kwargs["pipeline_mode"] = pl.Buffered(w_buffers)

    per_row = pl.pallas_call(
        kernel,
        out_shape=jax.ShapeDtypeStruct((B, 1), jnp.float32),
        grid_spec=pltpu.PrefetchScalarGridSpec(
            num_scalar_prefetch=0,
            grid=(n_b, n_c),                         # class (reduction) axis last
            in_specs=[
                pl.BlockSpec((tile_b, 1), lambda b, j: (b, 0)),   # labels
                pl.BlockSpec((tile_b, E), lambda b, j: (b, 0)),   # embeddings
                pl.BlockSpec((tile_c, E), lambda b, j: (j, 0),    # W class tile
                             **w_spec_kwargs),
            ],
            out_specs=pl.BlockSpec((tile_b, 1), lambda b, j: (b, 0)),
            scratch_shapes=[
                pltpu.VMEM((tile_b, E), w_dtype),      # normalized embeddings
                pltpu.VMEM((tile_b, 1), jnp.float32),  # running max
                pltpu.VMEM((tile_b, 1), jnp.float32),  # running sum-exp
                pltpu.VMEM((tile_b, 1), jnp.float32),  # target logit
            ],
        ),
        compiler_params=pltpu.CompilerParams(
            dimension_semantics=("parallel", "arbitrary"),
            vmem_limit_bytes=vmem_limit),
    )(labels2d, embeddings, W)

    return jnp.mean(per_row)


if __name__ == "__main__":
    # Small shapes consistent with the module's forward.
    num_classes = 512
    embedding_size = 64
    margin = 0.9
    scale = 200.0
    B_half = 4   # embedding1 / embedding2 each have 4 rows -> B = 8 after concat

    key = jax.random.PRNGKey(0)
    kw, ke1, ke2, kl1, kl2 = jax.random.split(key, 5)

    # xavier_normal_ init for W: std = sqrt(2 / (fan_in + fan_out))
    std = np.sqrt(2.0 / (num_classes + embedding_size)).astype(np.float32)
    W = jax.random.normal(kw, (num_classes, embedding_size), jnp.float32) * std

    emb1 = jax.random.normal(ke1, (B_half, embedding_size), jnp.float32)
    emb2 = jax.random.normal(ke2, (B_half, embedding_size), jnp.float32)
    lab1 = jax.random.randint(kl1, (B_half,), 0, num_classes, jnp.int32)
    lab2 = jax.random.randint(kl2, (B_half,), 0, num_classes, jnp.int32)

    # torch.cat([embedding1, embedding2]) / torch.cat([label1, label2])
    embeddings = jnp.concatenate([emb1, emb2], axis=0)
    labels = jnp.concatenate([lab1, lab2], axis=0)

    # Pure-JAX reference (mirrors the PyTorch forward exactly).
    en = embeddings / jnp.linalg.norm(embeddings, axis=1, keepdims=True)
    wn = W / jnp.linalg.norm(W, axis=1, keepdims=True)
    cosine = en @ wn.T
    eps = 1e-6
    idx = jnp.arange(cosine.shape[0])
    tgt = cosine[idx, labels]
    mod = jnp.cos(jnp.arccos(jnp.clip(tgt, -1 + eps, 1 - eps)) + margin)
    onehot = jax.nn.one_hot(labels, num_classes, dtype=jnp.float32)
    logits = (cosine + onehot * (mod - tgt)[:, None]) * scale
    ref = jnp.mean(jax.nn.logsumexp(logits, axis=1) - logits[idx, labels])

    # 1) f32 W, single class tile (auto tiling).
    loss = arcface_loss(embeddings, labels, W, margin=margin, scale=scale)
    loss = jax.block_until_ready(loss)
    np.testing.assert_allclose(np.asarray(loss), np.asarray(ref),
                               rtol=1e-3, atol=1e-2)

    # 2) f32 W, forced multi-tile class streaming (exercises the online LSE).
    loss_tiled = arcface_loss(embeddings, labels, W, margin=margin, scale=scale,
                              tile_c=128)
    loss_tiled = jax.block_until_ready(loss_tiled)
    np.testing.assert_allclose(np.asarray(loss_tiled), np.asarray(ref),
                               rtol=1e-3, atol=1e-2)

    # 3) bf16-W streaming path (native bf16 MXU; halves HBM traffic at large C).
    loss_bf16 = arcface_loss(embeddings, labels, W.astype(jnp.bfloat16),
                             margin=margin, scale=scale)
    loss_bf16 = jax.block_until_ready(loss_bf16)
    np.testing.assert_allclose(np.asarray(loss_bf16), np.asarray(ref),
                               rtol=5e-2, atol=1.0)

    print("KERNEL_OK")
</pallas_src>

<mosaic_0001>
module attributes {stable_mosaic.version = 11 : i64} {
  func.func @_arcface_kernel(%arg0: i32, %arg1: i32, %arg2: memref<8x1xi32, #tpu.memory_space<vmem>>, %arg3: memref<8x64xf32, #tpu.memory_space<vmem>>, %arg4: memref<512x64xf32, #tpu.memory_space<vmem>>, %arg5: memref<8x1xf32, #tpu.memory_space<vmem>>, %arg6: memref<8x64xf32, #tpu.memory_space<vmem>>, %arg7: memref<8x1xf32, #tpu.memory_space<vmem>>, %arg8: memref<8x1xf32, #tpu.memory_space<vmem>>, %arg9: memref<8x1xf32, #tpu.memory_space<vmem>>) attributes {dimension_semantics = [#tpu.dimension_semantics<parallel>, #tpu.dimension_semantics<arbitrary>], iteration_bounds = array<i64: 1, 1>, scalar_prefetch = 0 : i64, scratch_operands = 4 : i64, tpu.core_type = #tpu.core_type<tc>, window_params = [{transform_indices = @transform_0, window_bounds = array<i64: 8, 1>}, {transform_indices = @transform_1, window_bounds = array<i64: 8, 64>}, {transform_indices = @transform_2, window_bounds = array<i64: 512, 64>}, {transform_indices = @transform_3, window_bounds = array<i64: 8, 1>}]} {
    %c0_i32 = arith.constant 0 : i32
    %0 = arith.cmpi eq, %arg1, %c0_i32 : i32
    %1 = arith.extui %0 : i1 to i32
    %c0_i32_0 = arith.constant 0 : i32
    %2 = arith.cmpi ne, %1, %c0_i32_0 : i32
    scf.if %2 {
      %c0_39 = arith.constant 0 : index
      %c0_40 = arith.constant 0 : index
      %80 = vector.load %arg3[%c0_39, %c0_40] : memref<8x64xf32, #tpu.memory_space<vmem>>, vector<8x64xf32>
      %81 = arith.mulf %80, %80 : vector<8x64xf32>
      %cst_41 = arith.constant dense<0.000000e+00> : vector<8xf32>
      %82 = vector.multi_reduction <add>, %81, %cst_41 [1] : vector<8x64xf32> to vector<8xf32>
      %83 = vector.shape_cast %82 : vector<8xf32> to vector<8x1xf32>
      %84 = math.rsqrt %83 : vector<8x1xf32>
      %85 = vector.broadcast %84 : vector<8x1xf32> to vector<8x64xf32>
      %86 = arith.mulf %80, %85 : vector<8x64xf32>
      %c0_42 = arith.constant 0 : index
      %c0_43 = arith.constant 0 : index
      %87 = vector.load %arg6[%c0_42, %c0_43] : memref<8x64xf32, #tpu.memory_space<vmem>>, vector<8x64xf32>
      tpu.vector_store %arg6[%c0_42, %c0_43], %86 {strides = array<i32>} : memref<8x64xf32, #tpu.memory_space<vmem>>, vector<8x64xf32>,
      %cst_44 = arith.constant 0xFF800000 : f32
      %88 = vector.broadcast %cst_44 : f32 to vector<8x1xf32>
      %c0_45 = arith.constant 0 : index
      %c0_46 = arith.constant 0 : index
      %89 = vector.load %arg7[%c0_45, %c0_46] : memref<8x1xf32, #tpu.memory_space<vmem>>, vector<8x1xf32>
      tpu.vector_store %arg7[%c0_45, %c0_46], %88 {strides = array<i32>} : memref<8x1xf32, #tpu.memory_space<vmem>>, vector<8x1xf32>,
      %cst_47 = arith.constant 0.000000e+00 : f32
      %90 = vector.broadcast %cst_47 : f32 to vector<8x1xf32>
      %c0_48 = arith.constant 0 : index
      %c0_49 = arith.constant 0 : index
      %91 = vector.load %arg8[%c0_48, %c0_49] : memref<8x1xf32, #tpu.memory_space<vmem>>, vector<8x1xf32>
      tpu.vector_store %arg8[%c0_48, %c0_49], %90 {strides = array<i32>} : memref<8x1xf32, #tpu.memory_space<vmem>>, vector<8x1xf32>,
      %cst_50 = arith.constant 0.000000e+00 : f32
      %92 = vector.broadcast %cst_50 : f32 to vector<8x1xf32>
      %c0_51 = arith.constant 0 : index
      %c0_52 = arith.constant 0 : index
      %93 = vector.load %arg9[%c0_51, %c0_52] : memref<8x1xf32, #tpu.memory_space<vmem>>, vector<8x1xf32>
      tpu.vector_store %arg9[%c0_51, %c0_52], %92 {strides = array<i32>} : memref<8x1xf32, #tpu.memory_space<vmem>>, vector<8x1xf32>,
    } else {
    }
    %c0 = arith.constant 0 : index
    %c0_1 = arith.constant 0 : index
    %3 = vector.load %arg4[%c0, %c0_1] : memref<512x64xf32, #tpu.memory_space<vmem>>, vector<512x64xf32>
    %cst = arith.constant 1.000000e+00 : f32
    %4 = vector.broadcast %cst : f32 to vector<8x64xf32>
    %5 = arith.mulf %3, %3 : vector<512x64xf32>
    %cst_2 = arith.constant dense<0.000000e+00> : vector<8x512xf32>
    %6 = tpu.matmul %4, %5, %cst_2 {dimension_numbers = #tpu.dot_dimension_numbers<[1], [1], [0], [0], [0, 0, 1, 0], [], []>} : vector<8x64xf32>, vector<512x64xf32>, vector<8x512xf32> -> vector<8x512xf32>
    %7 = vector.extract_strided_slice %6 {offsets = [0, 0], sizes = [1, 512], strides = [1, 1]} : vector<8x512xf32> to vector<1x512xf32>
    %8 = math.rsqrt %7 : vector<1x512xf32>
    %c0_3 = arith.constant 0 : index
    %c0_4 = arith.constant 0 : index
    %9 = vector.load %arg6[%c0_3, %c0_4] : memref<8x64xf32, #tpu.memory_space<vmem>>, vector<8x64xf32>
    %cst_5 = arith.constant dense<0.000000e+00> : vector<8x512xf32>
    %10 = tpu.matmul %9, %3, %cst_5 {dimension_numbers = #tpu.dot_dimension_numbers<[1], [1], [0], [0], [0, 0, 1, 0], [], []>} : vector<8x64xf32>, vector<512x64xf32>, vector<8x512xf32> -> vector<8x512xf32>
    %11 = vector.broadcast %8 : vector<1x512xf32> to vector<8x512xf32>
    %12 = arith.mulf %10, %11 : vector<8x512xf32>
    %c0_6 = arith.constant 0 : index
    %c0_7 = arith.constant 0 : index
    %13 = vector.load %arg2[%c0_6, %c0_7] : memref<8x1xi32, #tpu.memory_space<vmem>>, vector<8x1xi32>
    %c512_i32 = arith.constant 512 : i32
    %14 = arith.muli %arg1, %c512_i32 : i32
    %15 = tpu.iota {dimensions = array<i32: 1>} : vector<8x512xi32>
    %16 = vector.broadcast %14 : i32 to vector<8x512xi32>
    %17 = arith.addi %15, %16 : vector<8x512xi32>
    %18 = vector.broadcast %13 : vector<8x1xi32> to vector<8x512xi32>
    %19 = arith.cmpi eq, %18, %17 : vector<8x512xi32>
    %cst_8 = arith.constant 0.000000e+00 : f32
    %20 = vector.broadcast %cst_8 : f32 to vector<8x512xf32>
    %21 = arith.select %19, %12, %20 : vector<8x512xi1>, vector<8x512xf32>
    %cst_9 = arith.constant dense<0.000000e+00> : vector<8xf32>
    %22 = vector.multi_reduction <add>, %21, %cst_9 [1] : vector<8x512xf32> to vector<8xf32>
    %23 = vector.shape_cast %22 : vector<8xf32> to vector<8x1xf32>
    %cst_10 = arith.constant -0.999998986 : f32
    %cst_11 = arith.constant 0.999998986 : f32
    %24 = vector.broadcast %cst_10 : f32 to vector<8x1xf32>
    %25 = arith.maximumf %24, %23 : vector<8x1xf32>
    %26 = vector.broadcast %cst_11 : f32 to vector<8x1xf32>
    %27 = arith.minimumf %26, %25 : vector<8x1xf32>
    %cst_12 = arith.constant 0.621609985 : f32
    %28 = vector.broadcast %cst_12 : f32 to vector<8x1xf32>
    %29 = arith.mulf %27, %28 : vector<8x1xf32>
    %30 = arith.mulf %27, %27 : vector<8x1xf32>
    %cst_13 = arith.constant 1.000000e+00 : f32
    %31 = vector.broadcast %cst_13 : f32 to vector<8x1xf32>
    %32 = arith.subf %31, %30 : vector<8x1xf32>
    %33 = math.sqrt %32 : vector<8x1xf32>
    %cst_14 = arith.constant 0.783326923 : f32
    %34 = vector.broadcast %cst_14 : f32 to vector<8x1xf32>
    %35 = arith.mulf %33, %34 : vector<8x1xf32>
    %36 = arith.subf %29, %35 : vector<8x1xf32>
    %37 = arith.subf %36, %23 : vector<8x1xf32>
    %cst_15 = arith.constant 2.000000e+02 : f32
    %38 = vector.broadcast %cst_15 : f32 to vector<8x1xf32>
    %39 = arith.mulf %37, %38 : vector<8x1xf32>
    %40 = vector.broadcast %14 : i32 to vector<8x1xi32>
    %41 = arith.cmpi sge, %13, %40 : vector<8x1xi32>
    %c512_i32_16 = arith.constant 512 : i32
    %42 = arith.addi %14, %c512_i32_16 : i32
    %43 = vector.broadcast %42 : i32 to vector<8x1xi32>
    %44 = arith.cmpi slt, %13, %43 : vector<8x1xi32>
    %45 = arith.andi %41, %44 : vector<8x1xi1>
    %cst_17 = arith.constant 2.000000e+02 : f32
    %46 = vector.broadcast %cst_17 : f32 to vector<8x512xf32>
    %47 = arith.mulf %12, %46 : vector<8x512xf32>
    %cst_18 = arith.constant 0.000000e+00 : f32
    %48 = vector.shape_cast %39 : vector<8x1xf32> to vector<8x1xf32>
    %49 = vector.broadcast %48 : vector<8x1xf32> to vector<8x512xf32>
    %50 = vector.broadcast %cst_18 : f32 to vector<8x512xf32>
    %51 = arith.select %19, %49, %50 : vector<8x512xi1>, vector<8x512xf32>
    %52 = arith.addf %47, %51 : vector<8x512xf32>
    %c0_19 = arith.constant 0 : index
    %c0_20 = arith.constant 0 : index
    %53 = vector.load %arg7[%c0_19, %c0_20] : memref<8x1xf32, #tpu.memory_space<vmem>>, vector<8x1xf32>
    %cst_21 = arith.constant dense<0xFF800000> : vector<8xf32>
    %54 = vector.multi_reduction <maximumf>, %52, %cst_21 [1] : vector<8x512xf32> to vector<8xf32>
    %55 = vector.shape_cast %54 : vector<8xf32> to vector<8x1xf32>
    %56 = arith.maximumf %53, %55 : vector<8x1xf32>
    %c0_22 = arith.constant 0 : index
    %c0_23 = arith.constant 0 : index
    %57 = vector.load %arg8[%c0_22, %c0_23] : memref<8x1xf32, #tpu.memory_space<vmem>>, vector<8x1xf32>
    %c0_24 = arith.constant 0 : index
    %c0_25 = arith.constant 0 : index
    %58 = vector.load %arg7[%c0_24, %c0_25] : memref<8x1xf32, #tpu.memory_space<vmem>>, vector<8x1xf32>
    %59 = arith.subf %58, %56 : vector<8x1xf32>
    %60 = math.exp %59 : vector<8x1xf32>
    %61 = arith.mulf %57, %60 : vector<8x1xf32>
    %62 = vector.broadcast %56 : vector<8x1xf32> to vector<8x512xf32>
    %63 = arith.subf %52, %62 : vector<8x512xf32>
    %64 = math.exp %63 : vector<8x512xf32>
    %cst_26 = arith.constant dense<0.000000e+00> : vector<8xf32>
    %65 = vector.multi_reduction <add>, %64, %cst_26 [1] : vector<8x512xf32> to vector<8xf32>
    %66 = vector.shape_cast %65 : vector<8xf32> to vector<8x1xf32>
    %67 = arith.addf %61, %66 : vector<8x1xf32>
    %c0_27 = arith.constant 0 : index
    %c0_28 = arith.constant 0 : index
    %68 = vector.load %arg8[%c0_27, %c0_28] : memref<8x1xf32, #tpu.memory_space<vmem>>, vector<8x1xf32>
    tpu.vector_store %arg8[%c0_27, %c0_28], %67 {strides = array<i32>} : memref<8x1xf32, #tpu.memory_space<vmem>>, vector<8x1xf32>,
    %c0_29 = arith.constant 0 : index
    %c0_30 = arith.constant 0 : index
    %69 = vector.load %arg7[%c0_29, %c0_30] : memref<8x1xf32, #tpu.memory_space<vmem>>, vector<8x1xf32>
    tpu.vector_store %arg7[%c0_29, %c0_30], %56 {strides = array<i32>} : memref<8x1xf32, #tpu.memory_space<vmem>>, vector<8x1xf32>,
    %c0_31 = arith.constant 0 : index
    %c0_32 = arith.constant 0 : index
    %70 = vector.load %arg9[%c0_31, %c0_32] : memref<8x1xf32, #tpu.memory_space<vmem>>, vector<8x1xf32>
    %cst_33 = arith.constant 2.000000e+02 : f32
    %71 = vector.broadcast %cst_33 : f32 to vector<8x1xf32>
    %72 = arith.mulf %36, %71 : vector<8x1xf32>
    %cst_34 = arith.constant 0.000000e+00 : f32
    %73 = vector.broadcast %cst_34 : f32 to vector<8x1xf32>
    %74 = arith.select %45, %72, %73 : vector<8x1xi1>, vector<8x1xf32>
    %75 = arith.addf %70, %74 : vector<8x1xf32>
    %c0_35 = arith.constant 0 : index
    %c0_36 = arith.constant 0 : index
    %76 = vector.load %arg9[%c0_35, %c0_36] : memref<8x1xf32, #tpu.memory_space<vmem>>, vector<8x1xf32>
    tpu.vector_store %arg9[%c0_35, %c0_36], %75 {strides = array<i32>} : memref<8x1xf32, #tpu.memory_space<vmem>>, vector<8x1xf32>,
    %c0_i32_37 = arith.constant 0 : i32
    %77 = arith.cmpi eq, %arg1, %c0_i32_37 : i32
    %78 = arith.extui %77 : i1 to i32
    %c0_i32_38 = arith.constant 0 : i32
    %79 = arith.cmpi ne, %78, %c0_i32_38 : i32
    scf.if %79 {
      %c0_39 = arith.constant 0 : index
      %c0_40 = arith.constant 0 : index
      %80 = vector.load %arg7[%c0_39, %c0_40] : memref<8x1xf32, #tpu.memory_space<vmem>>, vector<8x1xf32>
      %c0_41 = arith.constant 0 : index
      %c0_42 = arith.constant 0 : index
      %81 = vector.load %arg8[%c0_41, %c0_42] : memref<8x1xf32, #tpu.memory_space<vmem>>, vector<8x1xf32>
      %82 = math.log %81 : vector<8x1xf32>
      %83 = arith.addf %80, %82 : vector<8x1xf32>
      %c0_43 = arith.constant 0 : index
      %c0_44 = arith.constant 0 : index
      %84 = vector.load %arg9[%c0_43, %c0_44] : memref<8x1xf32, #tpu.memory_space<vmem>>, vector<8x1xf32>
      %85 = arith.subf %83, %84 : vector<8x1xf32>
      %c0_45 = arith.constant 0 : index
      %c0_46 = arith.constant 0 : index
      %86 = vector.load %arg5[%c0_45, %c0_46] : memref<8x1xf32, #tpu.memory_space<vmem>>, vector<8x1xf32>
      tpu.vector_store %arg5[%c0_45, %c0_46], %85 {strides = array<i32>} : memref<8x1xf32, #tpu.memory_space<vmem>>, vector<8x1xf32>,
    } else {
    }
    return
  }
  func.func @transform_0(%arg0: i32, %arg1: i32) -> (i32, i32) {
    %c0_i32 = arith.constant 0 : i32
    %c0_i32_0 = arith.constant 0 : i32
    return %arg0, %c0_i32 : i32, i32
  }
  func.func @transform_1(%arg0: i32, %arg1: i32) -> (i32, i32) {
    %c0_i32 = arith.constant 0 : i32
    %c0_i32_0 = arith.constant 0 : i32
    return %arg0, %c0_i32 : i32, i32
  }
  func.func @transform_2(%arg0: i32, %arg1: i32) -> (i32, i32) {
    %c0_i32 = arith.constant 0 : i32
    %c0_i32_0 = arith.constant 0 : i32
    return %arg1, %c0_i32 : i32, i32
  }
  func.func @transform_3(%arg0: i32, %arg1: i32) -> (i32, i32) {
    %c0_i32 = arith.constant 0 : i32
    %c0_i32_0 = arith.constant 0 : i32
    return %arg0, %c0_i32 : i32, i32
  }
}

</mosaic_0001>

<llo_original>
// kernel: tpu_custom_call.1
$region0: #{tpu_custom_call.1}
  #allocation0 [shape = 'u32[]', space=smem, size = 0x4, offset = 0x4, fixed_abs, tag = 'smem constant byte address 0x4 - core index']
  #allocation1 [shape = 'u32[144,128]{1,0:T(1,128)}', space=vmem, size = 0x12000, scoped, tag = 'internal scratch']
  #allocation2 [shape = 'f32[8,64]{1,0:T(8,128)}', space=vmem, size = 0x1000, scoped, tag = 'scratch operand']
  #allocation3 [shape = 'f32[8,1]{1,0:T(8,128)}', space=vmem, size = 0x1000, scoped, tag = 'scratch operand']
  #allocation4 [shape = 'f32[8,1]{1,0:T(8,128)}', space=vmem, size = 0x1000, scoped, tag = 'scratch operand']
  #allocation5 [shape = 'f32[8,1]{1,0:T(8,128)}', space=vmem, size = 0x1000, scoped, tag = 'scratch operand']
  %s0 = inlined_call_operand.vmem [shape: s32[8,1], index: 0, kind: input, shape index: {}]
  %s1 = inlined_call_operand.vmem [shape: f32[8,64], index: 1, kind: input, shape index: {}]
  %s2 = inlined_call_operand.vmem [shape: f32[512,64], index: 2, kind: input, shape index: {}]
  %s3 = inlined_call_operand.vmem [shape: f32[8,1], index: 3, kind: output, shape index: {}]
  %s4 = sld [smem:[#allocation0]]
  $region30: #{tpu_custom_call.1} parent=0
    _
  %s6 = ssub.s32 1, %s4
  %s7 = scalar_select 0, %s6, %s4
  // Predicated region
  $region2: #{tpu_custom_call.1} parent=0 // pred_check
    _
  $region3: #{tpu_custom_call.1} parent=0 // pred_check_branch
    %9 = sbr.rel (0) target = $region5
  $region4: #{tpu_custom_call.1} parent=0 // pred_region
    _
  $region5: #{tpu_custom_call.1} parent=0 // pred_fallthru
    _
  // Predicated region
  $region6: #{tpu_custom_call.1} parent=0 // pred_check
    _
  $region7: #{tpu_custom_call.1} parent=0 // pred_check_branch
    %11 = sbr.rel (0) target = $region9
  $region8: #{tpu_custom_call.1} parent=0 // pred_region
    _
  $region9: #{tpu_custom_call.1} parent=0 // pred_fallthru
    _
  // Predicated region
  $region10: #{tpu_custom_call.1} parent=0 // pred_check
    _
  $region11: #{tpu_custom_call.1} parent=0 // pred_check_branch
    %13 = sbr.rel (0) target = $region13
  $region12: #{tpu_custom_call.1} parent=0 // pred_region
    _
  $region13: #{tpu_custom_call.1} parent=0 // pred_fallthru
    _
  %p14 = scmp.eq.s32.totalorder 0, 0
  // Predicated region
  $region14: #{tpu_custom_call.1} parent=0 // pred_check
    %p15 = pneg %p14
  $region15: #{tpu_custom_call.1} parent=0 // pred_check_branch
    %17 = sbr.rel (%p15) target = $region17
  $region16: #{tpu_custom_call.1} parent=0 // pred_region
    %v18 = vld [vmem:[%s1] sm:$0xff]
    %v19 = vmul.f32 %v18, %v18
    %vm20 = vcmask 523264
    %v21 = vsel %vm20, %v19, 0.0
    %22 = vadd.xlane.f32.xlu0 %v21
    %v23 = vpop.xlane.xlu0 %22
    %v24 = vrsqrt.pop %v23
    %v25 = vmul.f32 %v18, %v24
    %26 = vst.msk [vmem:[#allocation2] sm:$0xff] %vm20, %v25
    %vm27 = vcmask 7168
    %28 = vst.msk [vmem:[#allocation3] sm:$0xff] %vm27, -inf
    %29 = vst.msk [vmem:[#allocation4] sm:$0xff] %vm27, 0.0
    %30 = vst.msk [vmem:[#allocation5] sm:$0xff] %vm27, 0.0
  $region17: #{tpu_custom_call.1} parent=0 // pred_fallthru
    _
  %v31 = vld [vmem:[%s2] sm:$0xff]
  %v32 = vld [vmem:[%s2 + $0x8] sm:$0xff]
  %v33 = vld [vmem:[%s2 + $0x10] sm:$0xff]
  %v34 = vld [vmem:[%s2 + $0x18] sm:$0xff]
  %v35 = vld [vmem:[%s2 + $0x20] sm:$0xff]
  %v36 = vld [vmem:[%s2 + $0x28] sm:$0xff]
  %v37 = vld [vmem:[%s2 + $0x30] sm:$0xff]
  %v38 = vld [vmem:[%s2 + $0x38] sm:$0xff]
  %v39 = vld [vmem:[%s2 + $0x40] sm:$0xff]
  %v40 = vld [vmem:[%s2 + $0x48] sm:$0xff]
  %v41 = vld [vmem:[%s2 + $0x50] sm:$0xff]
  %v42 = vld [vmem:[%s2 + $0x58] sm:$0xff]
  %v43 = vld [vmem:[%s2 + $0x60] sm:$0xff]
  %v44 = vld [vmem:[%s2 + $0x68] sm:$0xff]
  %v45 = vld [vmem:[%s2 + $0x70] sm:$0xff]
  %v46 = vld [vmem:[%s2 + $0x78] sm:$0xff]
  %v47 = vld [vmem:[%s2 + $0x80] sm:$0xff]
  %v48 = vld [vmem:[%s2 + $0x88] sm:$0xff]
  %v49 = vld [vmem:[%s2 + $0x90] sm:$0xff]
  %v50 = vld [vmem:[%s2 + $0x98] sm:$0xff]
  %v51 = vld [vmem:[%s2 + $0xa0] sm:$0xff]
  %v52 = vld [vmem:[%s2 + $0xa8] sm:$0xff]
  %v53 = vld [vmem:[%s2 + $0xb0] sm:$0xff]
  %v54 = vld [vmem:[%s2 + $0xb8] sm:$0xff]
  %v55 = vld [vmem:[%s2 + $0xc0] sm:$0xff]
  %v56 = vld [vmem:[%s2 + $0xc8] sm:$0xff]
  %v57 = vld [vmem:[%s2 + $0xd0] sm:$0xff]
  %v58 = vld [vmem:[%s2 + $0xd8] sm:$0xff]
  %v59 = vld [vmem:[%s2 + $0xe0] sm:$0xff]
  %v60 = vld [vmem:[%s2 + $0xe8] sm:$0xff]
  %v61 = vld [vmem:[%s2 + $0xf0] sm:$0xff]
  %v62 = vld [vmem:[%s2 + $0xf8] sm:$0xff]
  %v63 = vld [vmem:[%s2 + $0x100] sm:$0xff]
  %v64 = vld [vmem:[%s2 + $0x108] sm:$0xff]
  %v65 = vld [vmem:[%s2 + $0x110] sm:$0xff]
  %v66 = vld [vmem:[%s2 + $0x118] sm:$0xff]
  %v67 = vld [vmem:[%s2 + $0x120] sm:$0xff]
  %v68 = vld [vmem:[%s2 + $0x128] sm:$0xff]
  %v69 = vld [vmem:[%s2 + $0x130] sm:$0xff]
  %v70 = vld [vmem:[%s2 + $0x138] sm:$0xff]
  %v71 = vld [vmem:[%s2 + $0x140] sm:$0xff]
  %v72 = vld [vmem:[%s2 + $0x148] sm:$0xff]
  %v73 = vld [vmem:[%s2 + $0x150] sm:$0xff]
  %v74 = vld [vmem:[%s2 + $0x158] sm:$0xff]
  %v75 = vld [vmem:[%s2 + $0x160] sm:$0xff]
  %v76 = vld [vmem:[%s2 + $0x168] sm:$0xff]
  %v77 = vld [vmem:[%s2 + $0x170] sm:$0xff]
  %v78 = vld [vmem:[%s2 + $0x178] sm:$0xff]
  %v79 = vld [vmem:[%s2 + $0x180] sm:$0xff]
  %v80 = vld [vmem:[%s2 + $0x188] sm:$0xff]
  %v81 = vld [vmem:[%s2 + $0x190] sm:$0xff]
  %v82 = vld [vmem:[%s2 + $0x198] sm:$0xff]
  %v83 = vld [vmem:[%s2 + $0x1a0] sm:$0xff]
  %v84 = vld [vmem:[%s2 + $0x1a8] sm:$0xff]
  %v85 = vld [vmem:[%s2 + $0x1b0] sm:$0xff]
  %v86 = vld [vmem:[%s2 + $0x1b8] sm:$0xff]
  %v87 = vld [vmem:[%s2 + $0x1c0] sm:$0xff]
  %v88 = vld [vmem:[%s2 + $0x1c8] sm:$0xff]
  %v89 = vld [vmem:[%s2 + $0x1d0] sm:$0xff]
  %v90 = vld [vmem:[%s2 + $0x1d8] sm:$0xff]
  %v91 = vld [vmem:[%s2 + $0x1e0] sm:$0xff]
  %v92 = vld [vmem:[%s2 + $0x1e8] sm:$0xff]
  %v93 = vld [vmem:[%s2 + $0x1f0] sm:$0xff]
  %v94 = vld [vmem:[%s2 + $0x1f8] sm:$0xff]
  %v95 = vmul.f32 %v31, %v31
  %v96 = vmul.f32 %v32, %v32
  %v97 = vmul.f32 %v33, %v33
  %v98 = vmul.f32 %v34, %v34
  %v99 = vmul.f32 %v35, %v35
  %v100 = vmul.f32 %v36, %v36
  %v101 = vmul.f32 %v37, %v37
  %v102 = vmul.f32 %v38, %v38
  %v103 = vmul.f32 %v39, %v39
  %v104 = vmul.f32 %v40, %v40
  %v105 = vmul.f32 %v41, %v41
  %v106 = vmul.f32 %v42, %v42
  %v107 = vmul.f32 %v43, %v43
  %v108 = vmul.f32 %v44, %v44
  %v109 = vmul.f32 %v45, %v45
  %v110 = vmul.f32 %v46, %v46
  %v111 = vmul.f32 %v47, %v47
  %v112 = vmul.f32 %v48, %v48
  %v113 = vmul.f32 %v49, %v49
  %v114 = vmul.f32 %v50, %v50
  %v115 = vmul.f32 %v51, %v51
  %v116 = vmul.f32 %v52, %v52
  %v117 = vmul.f32 %v53, %v53
  %v118 = vmul.f32 %v54, %v54
  %v119 = vmul.f32 %v55, %v55
  %v120 = vmul.f32 %v56, %v56
  %v121 = vmul.f32 %v57, %v57
  %v122 = vmul.f32 %v58, %v58
  %v123 = vmul.f32 %v59, %v59
  %v124 = vmul.f32 %v60, %v60
  %v125 = vmul.f32 %v61, %v61
  %v126 = vmul.f32 %v62, %v62
  %v127 = vmul.f32 %v63, %v63
  %v128 = vmul.f32 %v64, %v64
  %v129 = vmul.f32 %v65, %v65
  %v130 = vmul.f32 %v66, %v66
  %v131 = vmul.f32 %v67, %v67
  %v132 = vmul.f32 %v68, %v68
  %v133 = vmul.f32 %v69, %v69
  %v134 = vmul.f32 %v70, %v70
  %v135 = vmul.f32 %v71, %v71
  %v136 = vmul.f32 %v72, %v72
  %v137 = vmul.f32 %v73, %v73
  %v138 = vmul.f32 %v74, %v74
  %v139 = vmul.f32 %v75, %v75
  %v140 = vmul.f32 %v76, %v76
  %v141 = vmul.f32 %v77, %v77
  %v142 = vmul.f32 %v78, %v78
  %v143 = vmul.f32 %v79, %v79
  %v144 = vmul.f32 %v80, %v80
  %v145 = vmul.f32 %v81, %v81
  %v146 = vmul.f32 %v82, %v82
  %v147 = vmul.f32 %v83, %v83
  %v148 = vmul.f32 %v84, %v84
  %v149 = vmul.f32 %v85, %v85
  %v150 = vmul.f32 %v86, %v86
  %v151 = vmul.f32 %v87, %v87
  %v152 = vmul.f32 %v88, %v88
  %v153 = vmul.f32 %v89, %v89
  %v154 = vmul.f32 %v90, %v90
  %v155 = vmul.f32 %v91, %v91
  %v156 = vmul.f32 %v92, %v92
  %v157 = vmul.f32 %v93, %v93
  %v158 = vmul.f32 %v94, %v94
  %vm159 = vcmask 523264
  %v161 = vsel %vm159, 1.0, 0
  %v164 = vsel %vm159, %v95, 0
  %v167 = vsel %vm159, %v96, 0
  %v170 = vsel %vm159, %v97, 0
  %v173 = vsel %vm159, %v98, 0
  %v176 = vsel %vm159, %v99, 0
  %v179 = vsel %vm159, %v100, 0
  %v182 = vsel %vm159, %v101, 0
  %v185 = vsel %vm159, %v102, 0
  %v188 = vsel %vm159, %v103, 0
  %v191 = vsel %vm159, %v104, 0
  %v194 = vsel %vm159, %v105, 0
  %v197 = vsel %vm159, %v106, 0
  %v200 = vsel %vm159, %v107, 0
  %v203 = vsel %vm159, %v108, 0
  %v206 = vsel %vm159, %v109, 0
  %v209 = vsel %vm159, %v110, 0
  %v212 = vsel %vm159, %v111, 0
  %v215 = vsel %vm159, %v112, 0
  %v218 = vsel %vm159, %v113, 0
  %v221 = vsel %vm159, %v114, 0
  %v224 = vsel %vm159, %v115, 0
  %v227 = vsel %vm159, %v116, 0
  %v230 = vsel %vm159, %v117, 0
  %v233 = vsel %vm159, %v118, 0
  %v236 = vsel %vm159, %v119, 0
  %v239 = vsel %vm159, %v120, 0
  %v242 = vsel %vm159, %v121, 0
  %v245 = vsel %vm159, %v122, 0
  %v248 = vsel %vm159, %v123, 0
  %v251 = vsel %vm159, %v124, 0
  %v254 = vsel %vm159, %v125, 0
  %v257 = vsel %vm159, %v126, 0
  %v260 = vsel %vm159, %v127, 0
  %v263 = vsel %vm159, %v128, 0
  %v266 = vsel %vm159, %v129, 0
  %v269 = vsel %vm159, %v130, 0
  %v272 = vsel %vm159, %v131, 0
  %v275 = vsel %vm159, %v132, 0
  %v278 = vsel %vm159, %v133, 0
  %v281 = vsel %vm159, %v134, 0
  %v284 = vsel %vm159, %v135, 0
  %v287 = vsel %vm159, %v136, 0
  %v290 = vsel %vm159, %v137, 0
  %v293 = vsel %vm159, %v138, 0
  %v296 = vsel %vm159, %v139, 0
  %v299 = vsel %vm159, %v140, 0
  %v302 = vsel %vm159, %v141, 0
  %v305 = vsel %vm159, %v142, 0
  %v308 = vsel %vm159, %v143, 0
  %v311 = vsel %vm159, %v144, 0
  %v314 = vsel %vm159, %v145, 0
  %v317 = vsel %vm159, %v146, 0
  %v320 = vsel %vm159, %v147, 0
  %v323 = vsel %vm159, %v148, 0
  %v326 = vsel %vm159, %v149, 0
  %v329 = vsel %vm159, %v150, 0
  %v332 = vsel %vm159, %v151, 0
  %v335 = vsel %vm159, %v152, 0
  %v338 = vsel %vm159, %v153, 0
  %v341 = vsel %vm159, %v154, 0
  %v344 = vsel %vm159, %v155, 0
  %v347 = vsel %vm159, %v156, 0
  %v350 = vsel %vm159, %v157, 0
  %v353 = vsel %vm159, %v158, 0
  %355 = vmatprep.subr.mxu0 0.0
  %356 = vmatpush1.xpose.msra.mxu0 %v164
  %357 = vmatprep.subr.mxu0 0.0
  %358 = vmatpush1.xpose.msra.mxu0 %v167
  %359 = vmatprep.subr.mxu0 0.0
  %360 = vmatpush1.xpose.msra.mxu0 %v170
  %361 = vmatprep.subr.mxu0 0.0
  %362 = vmatpush1.xpose.msra.mxu0 %v173
  %363 = vmatprep.subr.mxu0 0.0
  %364 = vmatpush1.xpose.msra.mxu0 %v176
  %365 = vmatprep.subr.mxu0 0.0
  %366 = vmatpush1.xpose.msra.mxu0 %v179
  %367 = vmatprep.subr.mxu0 0.0
  %368 = vmatpush1.xpose.msra.mxu0 %v182
  %369 = vmatprep.subr.mxu0 0.0
  %370 = vmatpush1.xpose.msra.mxu0 %v185
  %371 = vmatprep.subr.mxu0 0.0
  %372 = vmatpush1.xpose.msra.mxu0 %v188
  %373 = vmatprep.subr.mxu0 0.0
  %374 = vmatpush1.xpose.msra.mxu0 %v191
  %375 = vmatprep.subr.mxu0 0.0
  %376 = vmatpush1.xpose.msra.mxu0 %v194
  %377 = vmatprep.subr.mxu0 0.0
  %378 = vmatpush1.xpose.msra.mxu0 %v197
  %379 = vmatprep.subr.mxu0 0.0
  %380 = vmatpush1.xpose.msra.mxu0 %v200
  %381 = vmatprep.subr.mxu0 0.0
  %382 = vmatpush1.xpose.msra.mxu0 %v203
  %383 = vmatprep.subr.mxu0 0.0
  %384 = vmatpush1.xpose.msra.mxu0 %v206
  %385 = vmatprep.subr.mxu0 0.0
  %386 = vmatpush1.xpose.msra.mxu0 %v209
  %387 = vmatprep.subr.mxu0 0.0
  %388 = vmatpush1.xpose.msra.mxu0 %v212
  %389 = vmatprep.subr.mxu0 0.0
  %390 = vmatpush1.xpose.msra.mxu0 %v215
  %391 = vmatprep.subr.mxu0 0.0
  %392 = vmatpush1.xpose.msra.mxu0 %v218
  %393 = vmatprep.subr.mxu0 0.0
  %394 = vmatpush1.xpose.msra.mxu0 %v221
  %395 = vmatprep.subr.mxu0 0.0
  %396 = vmatpush1.xpose.msra.mxu0 %v224
  %397 = vmatprep.subr.mxu0 0.0
  %398 = vmatpush1.xpose.msra.mxu0 %v227
  %399 = vmatprep.subr.mxu0 0.0
  %400 = vmatpush1.xpose.msra.mxu0 %v230
  %401 = vmatprep.subr.mxu0 0.0
  %402 = vmatpush1.xpose.msra.mxu0 %v233
  %403 = vmatprep.subr.mxu0 0.0
  %404 = vmatpush1.xpose.msra.mxu0 %v236
  %405 = vmatprep.subr.mxu0 0.0
  %406 = vmatpush1.xpose.msra.mxu0 %v239
  %407 = vmatprep.subr.mxu0 0.0
  %408 = vmatpush1.xpose.msra.mxu0 %v242
  %409 = vmatprep.subr.mxu0 0.0
  %410 = vmatpush1.xpose.msra.mxu0 %v245
  %411 = vmatprep.subr.mxu0 0.0
  %412 = vmatpush1.xpose.msra.mxu0 %v248
  %413 = vmatprep.subr.mxu0 0.0
  %414 = vmatpush1.xpose.msra.mxu0 %v251
  %415 = vmatprep.subr.mxu0 0.0
  %416 = vmatpush1.xpose.msra.mxu0 %v254
  %417 = vmatprep.subr.mxu0 0.0
  %418 = vmatpush1.xpose.msra.mxu0 %v257
  %419 = vmatprep.mubr.f32.mxu0 0.0
  %420 = vmatmul.mubr.f32.gmra.mrb[0].mxu0 %v161
  %v421 = vpop.f32.mrb[0].mxu0
  %v422 = vadd.f32 0.0, %v421
  %v423 = vpop.f32.mrb[0].mxu0
  %v424 = vadd.f32 0.0, %v423
  %425 = vdwg.mxu0
  %426 = vmatprep.subr.mxu0 0.0
  %427 = vmatpush1.xpose.msra.mxu0 %v260
  %428 = vmatprep.subr.mxu0 0.0
  %429 = vmatpush1.xpose.msra.mxu0 %v263
  %430 = vmatprep.subr.mxu0 0.0
  %431 = vmatpush1.xpose.msra.mxu0 %v266
  %432 = vmatprep.subr.mxu0 0.0
  %433 = vmatpush1.xpose.msra.mxu0 %v269
  %434 = vmatprep.subr.mxu0 0.0
  %435 = vmatpush1.xpose.msra.mxu0 %v272
  %436 = vmatprep.subr.mxu0 0.0
  %437 = vmatpush1.xpose.msra.mxu0 %v275
  %438 = vmatprep.subr.mxu0 0.0
  %439 = vmatpush1.xpose.msra.mxu0 %v278
  %440 = vmatprep.subr.mxu0 0.0
  %441 = vmatpush1.xpose.msra.mxu0 %v281
  %442 = vmatprep.subr.mxu0 0.0
  %443 = vmatpush1.xpose.msra.mxu0 %v284
  %444 = vmatprep.subr.mxu0 0.0
  %445 = vmatpush1.xpose.msra.mxu0 %v287
  %446 = vmatprep.subr.mxu0 0.0
  %447 = vmatpush1.xpose.msra.mxu0 %v290
  %448 = vmatprep.subr.mxu0 0.0
  %449 = vmatpush1.xpose.msra.mxu0 %v293
  %450 = vmatprep.subr.mxu0 0.0
  %451 = vmatpush1.xpose.msra.mxu0 %v296
  %452 = vmatprep.subr.mxu0 0.0
  %453 = vmatpush1.xpose.msra.mxu0 %v299
  %454 = vmatprep.subr.mxu0 0.0
  %455 = vmatpush1.xpose.msra.mxu0 %v302
  %456 = vmatprep.subr.mxu0 0.0
  %457 = vmatpush1.xpose.msra.mxu0 %v305
  %458 = vmatprep.subr.mxu0 0.0
  %459 = vmatpush1.xpose.msra.mxu0 %v308
  %460 = vmatprep.subr.mxu0 0.0
  %461 = vmatpush1.xpose.msra.mxu0 %v311
  %462 = vmatprep.subr.mxu0 0.0
  %463 = vmatpush1.xpose.msra.mxu0 %v314
  %464 = vmatprep.subr.mxu0 0.0
  %465 = vmatpush1.xpose.msra.mxu0 %v317
  %466 = vmatprep.subr.mxu0 0.0
  %467 = vmatpush1.xpose.msra.mxu0 %v320
  %468 = vmatprep.subr.mxu0 0.0
  %469 = vmatpush1.xpose.msra.mxu0 %v323
  %470 = vmatprep.subr.mxu0 0.0
  %471 = vmatpush1.xpose.msra.mxu0 %v326
  %472 = vmatprep.subr.mxu0 0.0
  %473 = vmatpush1.xpose.msra.mxu0 %v329
  %474 = vmatprep.subr.mxu0 0.0
  %475 = vmatpush1.xpose.msra.mxu0 %v332
  %476 = vmatprep.subr.mxu0 0.0
  %477 = vmatpush1.xpose.msra.mxu0 %v335
  %478 = vmatprep.subr.mxu0 0.0
  %479 = vmatpush1.xpose.msra.mxu0 %v338
  %480 = vmatprep.subr.mxu0 0.0
  %481 = vmatpush1.xpose.msra.mxu0 %v341
  %482 = vmatprep.subr.mxu0 0.0
  %483 = vmatpush1.xpose.msra.mxu0 %v344
  %484 = vmatprep.subr.mxu0 0.0
  %485 = vmatpush1.xpose.msra.mxu0 %v347
  %486 = vmatprep.subr.mxu0 0.0
  %487 = vmatpush1.xpose.msra.mxu0 %v350
  %488 = vmatprep.subr.mxu0 0.0
  %489 = vmatpush1.xpose.msra.mxu0 %v353
  %490 = vmatprep.mubr.f32.mxu0 0.0
  %491 = vmatmul.mubr.f32.gmra.mrb[0].mxu0 %v161
  %v492 = vpop.f32.mrb[0].mxu0
  %v493 = vadd.f32 0.0, %v492
  %v494 = vpop.f32.mrb[0].mxu0
  %v495 = vadd.f32 0.0, %v494
  %496 = vdwg.mxu0
  %v497 = vrsqrt.pop %v422
  %v498 = vrsqrt.pop %v424
  %v499 = vrsqrt.pop %v493
  %v500 = vrsqrt.pop %v495
  %v501 = vld [vmem:[#allocation2] sm:$0xff]
  %v503 = vsel %vm159, %v501, 0
  %v506 = vsel %vm159, %v31, 0
  %v509 = vsel %vm159, %v32, 0
  %v512 = vsel %vm159, %v33, 0
  %v515 = vsel %vm159, %v34, 0
  %v518 = vsel %vm159, %v35, 0
  %v521 = vsel %vm159, %v36, 0
  %v524 = vsel %vm159, %v37, 0
  %v527 = vsel %vm159, %v38, 0
  %v530 = vsel %vm159, %v39, 0
  %v533 = vsel %vm159, %v40, 0
  %v536 = vsel %vm159, %v41, 0
  %v539 = vsel %vm159, %v42, 0
  %v542 = vsel %vm159, %v43, 0
  %v545 = vsel %vm159, %v44, 0
  %v548 = vsel %vm159, %v45, 0
  %v551 = vsel %vm159, %v46, 0
  %v554 = vsel %vm159, %v47, 0
  %v557 = vsel %vm159, %v48, 0
  %v560 = vsel %vm159, %v49, 0
  %v563 = vsel %vm159, %v50, 0
  %v566 = vsel %vm159, %v51, 0
  %v569 = vsel %vm159, %v52, 0
  %v572 = vsel %vm159, %v53, 0
  %v575 = vsel %vm159, %v54, 0
  %v578 = vsel %vm159, %v55, 0
  %v581 = vsel %vm159, %v56, 0
  %v584 = vsel %vm159, %v57, 0
  %v587 = vsel %vm159, %v58, 0
  %v590 = vsel %vm159, %v59, 0
  %v593 = vsel %vm159, %v60, 0
  %v596 = vsel %vm159, %v61, 0
  %v599 = vsel %vm159, %v62, 0
  %v602 = vsel %vm159, %v63, 0
  %v605 = vsel %vm159, %v64, 0
  %v608 = vsel %vm159, %v65, 0
  %v611 = vsel %vm159, %v66, 0
  %v614 = vsel %vm159, %v67, 0
  %v617 = vsel %vm159, %v68, 0
  %v620 = vsel %vm159, %v69, 0
  %v623 = vsel %vm159, %v70, 0
  %v626 = vsel %vm159, %v71, 0
  %v629 = vsel %vm159, %v72, 0
  %v632 = vsel %vm159, %v73, 0
  %v635 = vsel %vm159, %v74, 0
  %v638 = vsel %vm159, %v75, 0
  %v641 = vsel %vm159, %v76, 0
  %v644 = vsel %vm159, %v77, 0
  %v647 = vsel %vm159, %v78, 0
  %v650 = vsel %vm159, %v79, 0
  %v653 = vsel %vm159, %v80, 0
  %v656 = vsel %vm159, %v81, 0
  %v659 = vsel %vm159, %v82, 0
  %v662 = vsel %vm159, %v83, 0
  %v665 = vsel %vm159, %v84, 0
  %v668 = vsel %vm159, %v85, 0
  %v671 = vsel %vm159, %v86, 0
  %v674 = vsel %vm159, %v87, 0
  %v677 = vsel %vm159, %v88, 0
  %v680 = vsel %vm159, %v89, 0
  %v683 = vsel %vm159, %v90, 0
  %v686 = vsel %vm159, %v91, 0
  %v689 = vsel %vm159, %v92, 0
  %v692 = vsel %vm159, %v93, 0
  %v695 = vsel %vm159, %v94, 0
  %697 = vmatprep.subr.mxu0 0.0
  %698 = vmatpush1.xpose.msra.mxu0 %v506
  %699 = vmatprep.subr.mxu0 0.0
  %700 = vmatpush1.xpose.msra.mxu0 %v509
  %701 = vmatprep.subr.mxu0 0.0
  %702 = vmatpush1.xpose.msra.mxu0 %v512
  %703 = vmatprep.subr.mxu0 0.0
  %704 = vmatpush1.xpose.msra.mxu0 %v515
  %705 = vmatprep.subr.mxu0 0.0
  %706 = vmatpush1.xpose.msra.mxu0 %v518
  %707 = vmatprep.subr.mxu0 0.0
  %708 = vmatpush1.xpose.msra.mxu0 %v521
  %709 = vmatprep.subr.mxu0 0.0
  %710 = vmatpush1.xpose.msra.mxu0 %v524
  %711 = vmatprep.subr.mxu0 0.0
  %712 = vmatpush1.xpose.msra.mxu0 %v527
  %713 = vmatprep.subr.mxu0 0.0
  %714 = vmatpush1.xpose.msra.mxu0 %v530
  %715 = vmatprep.subr.mxu0 0.0
  %716 = vmatpush1.xpose.msra.mxu0 %v533
  %717 = vmatprep.subr.mxu0 0.0
  %718 = vmatpush1.xpose.msra.mxu0 %v536
  %719 = vmatprep.subr.mxu0 0.0
  %720 = vmatpush1.xpose.msra.mxu0 %v539
  %721 = vmatprep.subr.mxu0 0.0
  %722 = vmatpush1.xpose.msra.mxu0 %v542
  %723 = vmatprep.subr.mxu0 0.0
  %724 = vmatpush1.xpose.msra.mxu0 %v545
  %725 = vmatprep.subr.mxu0 0.0
  %726 = vmatpush1.xpose.msra.mxu0 %v548
  %727 = vmatprep.subr.mxu0 0.0
  %728 = vmatpush1.xpose.msra.mxu0 %v551
  %729 = vmatprep.subr.mxu0 0.0
  %730 = vmatpush1.xpose.msra.mxu0 %v554
  %731 = vmatprep.subr.mxu0 0.0
  %732 = vmatpush1.xpose.msra.mxu0 %v557
  %733 = vmatprep.subr.mxu0 0.0
  %734 = vmatpush1.xpose.msra.mxu0 %v560
  %735 = vmatprep.subr.mxu0 0.0
  %736 = vmatpush1.xpose.msra.mxu0 %v563
  %737 = vmatprep.subr.mxu0 0.0
  %738 = vmatpush1.xpose.msra.mxu0 %v566
  %739 = vmatprep.subr.mxu0 0.0
  %740 = vmatpush1.xpose.msra.mxu0 %v569
  %741 = vmatprep.subr.mxu0 0.0
  %742 = vmatpush1.xpose.msra.mxu0 %v572
  %743 = vmatprep.subr.mxu0 0.0
  %744 = vmatpush1.xpose.msra.mxu0 %v575
  %745 = vmatprep.subr.mxu0 0.0
  %746 = vmatpush1.xpose.msra.mxu0 %v578
  %747 = vmatprep.subr.mxu0 0.0
  %748 = vmatpush1.xpose.msra.mxu0 %v581
  %749 = vmatprep.subr.mxu0 0.0
  %750 = vmatpush1.xpose.msra.mxu0 %v584
  %751 = vmatprep.subr.mxu0 0.0
  %752 = vmatpush1.xpose.msra.mxu0 %v587
  %753 = vmatprep.subr.mxu0 0.0
  %754 = vmatpush1.xpose.msra.mxu0 %v590
  %755 = vmatprep.subr.mxu0 0.0
  %756 = vmatpush1.xpose.msra.mxu0 %v593
  %757 = vmatprep.subr.mxu0 0.0
  %758 = vmatpush1.xpose.msra.mxu0 %v596
  %759 = vmatprep.subr.mxu0 0.0
  %760 = vmatpush1.xpose.msra.mxu0 %v599
  %761 = vmatprep.mubr.f32.mxu0 0.0
  %762 = vmatmul.mubr.f32.gmra.mrb[0].mxu0 %v503
  %v763 = vpop.f32.mrb[0].mxu0
  %v764 = vadd.f32 0.0, %v763
  %v765 = vpop.f32.mrb[0].mxu0
  %v766 = vadd.f32 0.0, %v765
  %767 = vdwg.mxu0
  %768 = vmatprep.subr.mxu0 0.0
  %769 = vmatpush1.xpose.msra.mxu0 %v602
  %770 = vmatprep.subr.mxu0 0.0
  %771 = vmatpush1.xpose.msra.mxu0 %v605
  %772 = vmatprep.subr.mxu0 0.0
  %773 = vmatpush1.xpose.msra.mxu0 %v608
  %774 = vmatprep.subr.mxu0 0.0
  %775 = vmatpush1.xpose.msra.mxu0 %v611
  %776 = vmatprep.subr.mxu0 0.0
  %777 = vmatpush1.xpose.msra.mxu0 %v614
  %778 = vmatprep.subr.mxu0 0.0
  %779 = vmatpush1.xpose.msra.mxu0 %v617
  %780 = vmatprep.subr.mxu0 0.0
  %781 = vmatpush1.xpose.msra.mxu0 %v620
  %782 = vmatprep.subr.mxu0 0.0
  %783 = vmatpush1.xpose.msra.mxu0 %v623
  %784 = vmatprep.subr.mxu0 0.0
  %785 = vmatpush1.xpose.msra.mxu0 %v626
  %786 = vmatprep.subr.mxu0 0.0
  %787 = vmatpush1.xpose.msra.mxu0 %v629
  %788 = vmatprep.subr.mxu0 0.0
  %789 = vmatpush1.xpose.msra.mxu0 %v632
  %790 = vmatprep.subr.mxu0 0.0
  %791 = vmatpush1.xpose.msra.mxu0 %v635
  %792 = vmatprep.subr.mxu0 0.0
  %793 = vmatpush1.xpose.msra.mxu0 %v638
  %794 = vmatprep.subr.mxu0 0.0
  %795 = vmatpush1.xpose.msra.mxu0 %v641
  %796 = vmatprep.subr.mxu0 0.0
  %797 = vmatpush1.xpose.msra.mxu0 %v644
  %798 = vmatprep.subr.mxu0 0.0
  %799 = vmatpush1.xpose.msra.mxu0 %v647
  %800 = vmatprep.subr.mxu0 0.0
  %801 = vmatpush1.xpose.msra.mxu0 %v650
  %802 = vmatprep.subr.mxu0 0.0
  %803 = vmatpush1.xpose.msra.mxu0 %v653
  %804 = vmatprep.subr.mxu0 0.0
  %805 = vmatpush1.xpose.msra.mxu0 %v656
  %806 = vmatprep.subr.mxu0 0.0
  %807 = vmatpush1.xpose.msra.mxu0 %v659
  %808 = vmatprep.subr.mxu0 0.0
  %809 = vmatpush1.xpose.msra.mxu0 %v662
  %810 = vmatprep.subr.mxu0 0.0
  %811 = vmatpush1.xpose.msra.mxu0 %v665
  %812 = vmatprep.subr.mxu0 0.0
  %813 = vmatpush1.xpose.msra.mxu0 %v668
  %814 = vmatprep.subr.mxu0 0.0
  %815 = vmatpush1.xpose.msra.mxu0 %v671
  %816 = vmatprep.subr.mxu0 0.0
  %817 = vmatpush1.xpose.msra.mxu0 %v674
  %818 = vmatprep.subr.mxu0 0.0
  %819 = vmatpush1.xpose.msra.mxu0 %v677
  %820 = vmatprep.subr.mxu0 0.0
  %821 = vmatpush1.xpose.msra.mxu0 %v680
  %822 = vmatprep.subr.mxu0 0.0
  %823 = vmatpush1.xpose.msra.mxu0 %v683
  %824 = vmatprep.subr.mxu0 0.0
  %825 = vmatpush1.xpose.msra.mxu0 %v686
  %826 = vmatprep.subr.mxu0 0.0
  %827 = vmatpush1.xpose.msra.mxu0 %v689
  %828 = vmatprep.subr.mxu0 0.0
  %829 = vmatpush1.xpose.msra.mxu0 %v692
  %830 = vmatprep.subr.mxu0 0.0
  %831 = vmatpush1.xpose.msra.mxu0 %v695
  %832 = vmatprep.mubr.f32.mxu0 0.0
  %833 = vmatmul.mubr.f32.gmra.mrb[0].mxu0 %v503
  %v834 = vpop.f32.mrb[0].mxu0
  %v835 = vadd.f32 0.0, %v834
  %v836 = vpop.f32.mrb[0].mxu0
  %v837 = vadd.f32 0.0, %v836
  %838 = vdwg.mxu0
  %v839 = vlaneseq
  %v840 = vshrl.u32 %v839, 7
  %v841 = vsub.s32 0, %v840
  %v842 = vrot.slane %v497, %v841
  %v843 = vlaneseq
  %v844 = vshrl.u32 %v843, 7
  %v845 = vsub.s32 0, %v844
  %v846 = vrot.slane %v498, %v845
  %v847 = vlaneseq
  %v848 = vshrl.u32 %v847, 7
  %v849 = vsub.s32 0, %v848
  %v850 = vrot.slane %v499, %v849
  %v851 = vlaneseq
  %v852 = vshrl.u32 %v851, 7
  %v853 = vsub.s32 0, %v852
  %v854 = vrot.slane %v500, %v853
  %v855 = vmul.f32 %v764, %v842
  %v856 = vmul.f32 %v766, %v846
  %v857 = vmul.f32 %v835, %v850
  %v858 = vmul.f32 %v837, %v854
  %v859 = vld [vmem:[%s0] sm:$0xff]
  %s860 = smul.u32 0, 512
  %v861 = vlaneseq
  %v862 = vand.u32 %v861, 127
  %v863 = vadd.s32 %v862, 128
  %v864 = vadd.s32 %v862, 256
  %v865 = vadd.s32 %v862, 384
  %v866 = vstv %s860
  %v867 = vadd.s32 %v862, %v866
  %v868 = vadd.s32 %v863, %v866
  %v869 = vadd.s32 %v864, %v866
  %v870 = vadd.s32 %v865, %v866
  %871 = vset.pattern.permute.xlu0 0
  %872 = vperm.xlu0 %871, %v859
  %v873 = vpop.permute.xlu0 %872
  %vm874 = vcmp.eq.s32.totalorder %v873, %v867
  %vm875 = vcmp.eq.s32.totalorder %v873, %v868
  %vm876 = vcmp.eq.s32.totalorder %v873, %v869
  %vm877 = vcmp.eq.s32.totalorder %v873, %v870
  %v878 = vsel %vm874, %v855, 0.0
  %v879 = vsel %vm875, %v856, 0.0
  %v880 = vsel %vm876, %v857, 0.0
  %v881 = vsel %vm877, %v858, 0.0
  %v882 = vadd.f32 %v878, %v879
  %v883 = vadd.f32 %v882, %v880
  %v884 = vadd.f32 %v883, %v881
  %885 = vadd.xlane.f32.xlu0 %v884
  %v886 = vpop.xlane.xlu0 %885
  %v887 = vmax.f32 %v886, -0.999999
  %v888 = vmin.f32 %v887, 0.999999
  %v889 = vmul.f32 %v888, 0.62161
  %v890 = vmul.f32 %v888, %v888
  %v891 = vsub.f32 1.0, %v890
  %v892 = vrsqrt.pop %v891
  %v893 = vmul.f32 %v891, %v892
  %vm894 = vcmp.eq.f32.partialorder %v891, inf
  %v895 = vsel %vm894, %v891, %v893
  %vm896 = vcmp.eq.f32.partialorder %v891, 0.0
  %v897 = vand.u32 %v891, 2147483648
  %v898 = vsel %vm896, %v897, %v895
  %v899 = vmul.f32 %v898, 0.7833269
  %v900 = vsub.f32 %v889, %v899
  %v901 = vsub.f32 %v900, %v886
  %v902 = vmul.f32 %v901, 200.0
  %vm903 = vcmp.ge.s32.totalorder %v859, %v866
  %s904 = sadd.s32 %s860, 512
  %v905 = vstv %s904
  %vm906 = vcmp.lt.s32.totalorder %v859, %v905
  %vm907 = vmand %vm903, %vm906
  %v908 = vmul.f32 %v855, 200.0
  %v909 = vmul.f32 %v856, 200.0
  %v910 = vmul.f32 %v857, 200.0
  %v911 = vmul.f32 %v858, 200.0
  %v912 = vsel %vm874, %v902, 0.0
  %v913 = vsel %vm875, %v902, 0.0
  %v914 = vsel %vm876, %v902, 0.0
  %v915 = vsel %vm877, %v902, 0.0
  %v916 = vadd.f32 %v908, %v912
  %v917 = vadd.f32 %v909, %v913
  %v918 = vadd.f32 %v910, %v914
  %v919 = vadd.f32 %v911, %v915
  %v920 = vld [vmem:[#allocation3] sm:$0xff]
  %v921 = vmax.f32 %v916, %v917
  %v922 = vmax.f32 %v918, %v919
  %v923 = vmax.f32 %v921, %v922
  %924 = vmax.xlane.f32.xlu0 %v923
  %v925 = vpop.xlane.xlu0 %924
  %v926 = vmax.f32 %v920, %v925
  %v927 = vld [vmem:[#allocation4] sm:$0xff]
  %v928 = vsub.f32 %v920, %v926
  %v929 = vmul.f32 %v928, 1.442695
  %v930 = vpow.pop %v929
  %v931 = vmul.f32 %v927, %v930
  %933 = vset.pattern.permute.xlu0 0
  %934 = vperm.xlu0 %933, %v926
  %v935 = vpop.permute.xlu0 %934
  %v937 = vsub.f32 %v916, %v935
  %v938 = vsub.f32 %v917, %v935
  %v939 = vsub.f32 %v918, %v935
  %v940 = vsub.f32 %v919, %v935
  %v941 = vmul.f32 %v937, 1.442695
  %v942 = vpow.pop %v941
  %v943 = vmul.f32 %v938, 1.442695
  %v944 = vpow.pop %v943
  %v945 = vmul.f32 %v939, 1.442695
  %v946 = vpow.pop %v945
  %v947 = vmul.f32 %v940, 1.442695
  %v948 = vpow.pop %v947
  %v949 = vadd.f32 %v942, %v944
  %v950 = vadd.f32 %v949, %v946
  %v951 = vadd.f32 %v950, %v948
  %952 = vadd.xlane.f32.xlu0 %v951
  %v953 = vpop.xlane.xlu0 %952
  %v954 = vadd.f32 %v931, %v953
  %vm955 = vcmask 7168
  %956 = vst.msk [vmem:[#allocation4] sm:$0xff] %vm955, %v954
  %957 = vst.msk [vmem:[#allocation3] sm:$0xff] %vm955, %v926
  %v958 = vld [vmem:[#allocation5] sm:$0xff]
  %v959 = vmul.f32 %v900, 200.0
  %v960 = vsel %vm907, %v959, 0.0
  %v961 = vadd.f32 %v958, %v960
  %962 = vst.msk [vmem:[#allocation5] sm:$0xff] %vm955, %v961
  // Predicated region
  $region18: #{tpu_custom_call.1} parent=0 // pred_check
    %p963 = pneg %p14
  $region19: #{tpu_custom_call.1} parent=0 // pred_check_branch
    %965 = sbr.rel (%p963) target = $region21
  $region20: #{tpu_custom_call.1} parent=0 // pred_region
    %v966 = vld [vmem:[#allocation3] sm:$0xff]
    %v967 = vld [vmem:[#allocation4] sm:$0xff]
    %v968 = vlog2.pop %v967
    %v969 = vmul.f32 %v968, 0.6931472
    %v970 = vadd.f32 %v966, %v969
    %v971 = vld [vmem:[#allocation5] sm:$0xff]
    %v972 = vsub.f32 %v970, %v971
    %973 = vst.msk [vmem:[%s3] sm:$0xff] %vm955, %v972
  $region21: #{tpu_custom_call.1} parent=0 // pred_fallthru
    _
  // Predicated region
  $region22: #{tpu_custom_call.1} parent=0 // pred_check
    _
  $region23: #{tpu_custom_call.1} parent=0 // pred_check_branch
    %975 = sbr.rel (0) target = $region25
  $region24: #{tpu_custom_call.1} parent=0 // pred_region
    _
  $region25: #{tpu_custom_call.1} parent=0 // pred_fallthru
    _
  // Predicated region
  $region26: #{tpu_custom_call.1} parent=0 // pred_check
    _
  $region27: #{tpu_custom_call.1} parent=0 // pred_check_branch
    %977 = sbr.rel (0) target = $region29
  $region28: #{tpu_custom_call.1} parent=0 // pred_region
    _
  $region29: #{tpu_custom_call.1} parent=0 // pred_fallthru
    _

</llo_original>
